<compile_context>
chip_gen: v5e
topology: v5e:2x2
jax: 0.10.0
libtpu: 0.0.40
codegen_flags: <defaults>
</compile_context>

<pallas_src>
import functools
import math

import jax
import jax.numpy as jnp
from jax import lax
from jax.experimental import pallas as pl
from jax.experimental.pallas import tpu as pltpu


# ----------------------------------------------------------------------------
# Per-chip configuration
# ----------------------------------------------------------------------------

def _tpu_generation():
    try:
        kind = jax.devices()[0].device_kind.lower()
    except Exception:
        return 0
    if "v7" in kind or "7x" in kind:
        return 7
    if "v6" in kind:
        return 6
    if "v5" in kind:
        return 5
    if "v4" in kind:
        return 4
    return 0


_TPU_GEN = _tpu_generation()

# v4/v5e/v6e have 128 MiB physical VMEM -> large scoped limit; v7x has 64 MiB.
# Unknown chip: keep the conservative 32 MiB.
if _TPU_GEN in (4, 5, 6):
    _VMEM_LIMIT = 96 * 1024 * 1024
elif _TPU_GEN == 7:
    _VMEM_LIMIT = 48 * 1024 * 1024
else:
    _VMEM_LIMIT = 32 * 1024 * 1024

# bf16 EUP exists on v6e/v7x -> compute softmax exponentials in bf16 there.
# v5e has no bf16 VPU/EUP -> keep exp in f32.
_EXP_DTYPE = jnp.bfloat16 if _TPU_GEN in (6, 7) else jnp.float32


# ----------------------------------------------------------------------------
# Tile selection helper
# ----------------------------------------------------------------------------

def _pick_tile(dim, target, granule):
    """Largest tile <= target that is a multiple of `granule` and divides `dim`.

    Falls back to the full dimension (always a legal block) if no such tile
    exists, e.g. for small test shapes below TPU tile granularity.
    TODO(synk): replace the full-dim fallback with a pl.cdiv grid + masked
    tail so awkward (e.g. prime) sizes cannot blow the VMEM budget on v7x.
    """
    if dim <= target:
        return dim
    t = (target // granule) * granule
    while t >= granule:
        if dim % t == 0:
            return t
        t -= granule
    return dim


# ----------------------------------------------------------------------------
# Tiled dense (x @ w_t + b) kernels (bf16 MXU operands, f32 accumulate)
# ----------------------------------------------------------------------------

def _dense_kernel(x_ref, w_ref, b_ref, o_ref, acc_ref):
    # x: (tm, tk)   w: (tk, tn) [pre-transposed weight]   b: (1, tn)
    @pl.when(pl.program_id(2) == 0)
    def _():
        acc_ref[...] = jnp.zeros_like(acc_ref)

    acc_ref[...] += jnp.dot(
        x_ref[...].astype(jnp.bfloat16),
        w_ref[...].astype(jnp.bfloat16),
        preferred_element_type=jnp.float32,
    )

    @pl.when(pl.program_id(2) == pl.num_programs(2) - 1)
    def _():
        o_ref[...] = (acc_ref[...] + b_ref[...].astype(jnp.float32)).astype(
            o_ref.dtype
        )


def pallas_dense(x, w_t, b, out_dtype, *, tm_target=512, tn_target=512,
                 tk_target=512):
    """x: (T, Kin), w_t: (Kin, Nout) pre-transposed, b: (Nout,) -> (T, Nout)."""
    T, Kin = x.shape
    kin_w, Nout = w_t.shape
    assert kin_w == Kin

    tm = _pick_tile(T, tm_target, 16)
    tn = _pick_tile(Nout, tn_target, 128)
    tk = _pick_tile(Kin, tk_target, 128)
    grid = (T // tm, Nout // tn, Kin // tk)

    b2 = b.astype(jnp.float32).reshape(1, Nout)
    cost = pl.CostEstimate(
        flops=2 * T * Kin * Nout,
        transcendentals=0,
        bytes_accessed=(T * Kin * x.dtype.itemsize
                        + Kin * Nout * w_t.dtype.itemsize
                        + T * Nout * jnp.dtype(out_dtype).itemsize
                        + Nout * 4),
    )

    return pl.pallas_call(
        _dense_kernel,
        out_shape=jax.ShapeDtypeStruct((T, Nout), out_dtype),
        grid_spec=pltpu.PrefetchScalarGridSpec(
            num_scalar_prefetch=0,
            grid=grid,
            in_specs=[
                pl.BlockSpec((tm, tk), lambda i, j, k: (i, k)),
                pl.BlockSpec((tk, tn), lambda i, j, k: (k, j)),
                pl.BlockSpec((1, tn), lambda i, j, k: (0, j)),
            ],
            out_specs=pl.BlockSpec((tm, tn), lambda i, j, k: (i, j)),
            scratch_shapes=[pltpu.VMEM((tm, tn), jnp.float32)],
        ),
        compiler_params=pltpu.CompilerParams(
            dimension_semantics=("parallel", "parallel", "arbitrary"),
            vmem_limit_bytes=_VMEM_LIMIT,
        ),
        cost_estimate=cost,
    )(x, w_t, b2)


def _dense_qkv_kernel(x_ref, w_ref, b_ref, o_ref, acc_ref):
    # x: (tm, tk)  w: (1, tk, tn)  b: (1, 1, tn)  o: (1, tm, tn)
    @pl.when(pl.program_id(3) == 0)
    def _():
        acc_ref[...] = jnp.zeros_like(acc_ref)

    acc_ref[...] += jnp.dot(
        x_ref[...].astype(jnp.bfloat16),
        w_ref[0].astype(jnp.bfloat16),
        preferred_element_type=jnp.float32,
    )

    @pl.when(pl.program_id(3) == pl.num_programs(3) - 1)
    def _():
        o_ref[0] = (acc_ref[...] + b_ref[0].astype(jnp.float32)).astype(
            o_ref.dtype
        )


def pallas_qkv_dense(x, w3_t, b3, out_dtype, *, tm_target=512, tn_target=512,
                     tk_target=512):
    """Fused QKV projection.

    x: (T, Kin), w3_t: (3, Kin, M) pre-transposed, b3: (3, M) -> (3, T, M).
    The stacked output is consumed directly by the flash kernel (no XLA
    lane-slice copies to split q/k/v).
    """
    T, Kin = x.shape
    G, kin_w, Nout = w3_t.shape
    assert kin_w == Kin and G == 3

    tm = _pick_tile(T, tm_target, 16)
    tn = _pick_tile(Nout, tn_target, 128)
    tk = _pick_tile(Kin, tk_target, 128)
    grid = (G, T // tm, Nout // tn, Kin // tk)

    b3r = b3.astype(jnp.float32).reshape(G, 1, Nout)
    cost = pl.CostEstimate(
        flops=2 * G * T * Kin * Nout,
        transcendentals=0,
        bytes_accessed=(G * T * Kin * x.dtype.itemsize
                        + G * Kin * Nout * w3_t.dtype.itemsize
                        + G * T * Nout * jnp.dtype(out_dtype).itemsize),
    )

    return pl.pallas_call(
        _dense_qkv_kernel,
        out_shape=jax.ShapeDtypeStruct((G, T, Nout), out_dtype),
        grid_spec=pltpu.PrefetchScalarGridSpec(
            num_scalar_prefetch=0,
            grid=grid,
            in_specs=[
                pl.BlockSpec((tm, tk), lambda p, i, j, k: (i, k)),
                pl.BlockSpec((1, tk, tn), lambda p, i, j, k: (p, k, j)),
                pl.BlockSpec((1, 1, tn), lambda p, i, j, k: (p, 0, j)),
            ],
            out_specs=pl.BlockSpec((1, tm, tn), lambda p, i, j, k: (p, i, j)),
            scratch_shapes=[pltpu.VMEM((tm, tn), jnp.float32)],
        ),
        compiler_params=pltpu.CompilerParams(
            dimension_semantics=("parallel", "parallel", "parallel",
                                 "arbitrary"),
            vmem_limit_bytes=_VMEM_LIMIT,
        ),
        cost_estimate=cost,
    )(x, w3_t, b3r)


# ----------------------------------------------------------------------------
# Flash-style multi-head SDPA kernel (heads interleaved on the lane axis)
# ----------------------------------------------------------------------------

def _flash_attn_kernel(q_ref, k_ref, v_ref, o_ref, m_sc, l_sc, acc_sc, *,
                       num_heads, head_dim, exp_dtype):
    kv = pl.program_id(2)

    @pl.when(kv == 0)
    def _():
        m_sc[...] = jnp.full_like(m_sc, -jnp.inf)
        l_sc[...] = jnp.zeros_like(l_sc)
        acc_sc[...] = jnp.zeros_like(acc_sc)

    # Inputs arrive bf16 from the projections; keep MXU operands bf16.
    q = q_ref[0, 0].astype(jnp.bfloat16)   # (tq,  M)
    k = k_ref[0, 0].astype(jnp.bfloat16)   # (tkv, M)
    v = v_ref[0, 0].astype(jnp.bfloat16)   # (tkv, M)

    for h in range(num_heads):
        sl = pl.ds(h * head_dim, head_dim)
        qh = q[:, sl]   # (tq,  Dh)
        kh = k[:, sl]   # (tkv, Dh)
        vh = v[:, sl]   # (tkv, Dh)

        # 1/sqrt(Dh) is folded into Wq/bq at construction -> no scale here.
        s = lax.dot_general(
            qh, kh, (((1,), (1,)), ((), ())),
            preferred_element_type=jnp.float32,
        )  # (tq, tkv) f32

        m_prev = m_sc[h]    # (tq, 1)
        l_prev = l_sc[h]    # (tq, 1)

        m_new = jnp.maximum(m_prev, jnp.max(s, axis=-1, keepdims=True))
        # Exponentials on the EUP; bf16 on v6e/v7x, f32 on v5e.  m/l/acc stay
        # in f32.
        alpha = jnp.exp((m_prev - m_new).astype(exp_dtype)).astype(jnp.float32)
        p = jnp.exp((s - m_new).astype(exp_dtype))
        l_sc[h] = alpha * l_prev + jnp.sum(
            p.astype(jnp.float32), axis=-1, keepdims=True)
        acc_sc[h] = alpha * acc_sc[h] + jnp.dot(
            p.astype(jnp.bfloat16), vh, preferred_element_type=jnp.float32)
        m_sc[h] = m_new

    # Finalize hoisted out of the per-head loop: one pl.when region per grid
    # step, EUP approx reciprocal for the softmax denominator.
    @pl.when(kv == pl.num_programs(2) - 1)
    def _():
        inv_l = pl.reciprocal(l_sc[...], approx=True)   # (H, tq, 1)
        for h in range(num_heads):
            # TODO(synk): when head_dim < 128 these per-head stores are masked
            # sub-lane vst; a single lane-dense (tq, M) store would need a
            # (H, tq, Dh) -> (tq, M) relayout (only once per q block here).
            o_ref[0, :, pl.ds(h * head_dim, head_dim)] = (
                acc_sc[h] * inv_l[h]).astype(o_ref.dtype)


def pallas_sdpa(q_arr, k_arr, v_arr, q_sel, k_sel, v_sel, num_heads, *,
                tq_target=256, tkv_target=512, out_dtype=jnp.bfloat16):
    """q_arr/k_arr/v_arr: (G, N, S, M) stacks (may be the same array);
    q_sel/k_sel/v_sel pick the leading index. Heads interleaved along M.
    Returns (N, S, M).
    """
    _, N, S, M = q_arr.shape
    _, _, Skv, _ = k_arr.shape
    assert M % num_heads == 0
    head_dim = M // num_heads

    tq = _pick_tile(S, tq_target, 16)
    tkv = _pick_tile(Skv, tkv_target, 128)
    grid = (N, S // tq, Skv // tkv)

    kernel = functools.partial(
        _flash_attn_kernel, num_heads=num_heads, head_dim=head_dim,
        exp_dtype=_EXP_DTYPE)

    itemsize = q_arr.dtype.itemsize
    n_q_blocks = S // tq
    cost = pl.CostEstimate(
        flops=4 * N * num_heads * S * Skv * head_dim,
        transcendentals=N * num_heads * S * Skv,
        bytes_accessed=(2 * N * S * M
                        + 2 * N * Skv * M * n_q_blocks) * itemsize,
    )

    return pl.pallas_call(
        kernel,
        out_shape=jax.ShapeDtypeStruct((N, S, M), out_dtype),
        grid_spec=pltpu.PrefetchScalarGridSpec(
            num_scalar_prefetch=0,
            grid=grid,
            in_specs=[
                pl.BlockSpec((1, 1, tq, M), lambda n, i, j: (q_sel, n, i, 0)),
                pl.BlockSpec((1, 1, tkv, M), lambda n, i, j: (k_sel, n, j, 0)),
                pl.BlockSpec((1, 1, tkv, M), lambda n, i, j: (v_sel, n, j, 0)),
            ],
            out_specs=pl.BlockSpec((1, tq, M), lambda n, i, j: (n, i, 0)),
            # NOTE: the size-1 lane dim of m/l pads to 128 lanes in VMEM; tq is
            # kept moderate (256) so this stays within v7x's 64 MiB budget.
            scratch_shapes=[
                pltpu.VMEM((num_heads, tq, 1), jnp.float32),         # m
                pltpu.VMEM((num_heads, tq, 1), jnp.float32),         # l
                pltpu.VMEM((num_heads, tq, head_dim), jnp.float32),  # acc
            ],
        ),
        compiler_params=pltpu.CompilerParams(
            dimension_semantics=("parallel", "parallel", "arbitrary"),
            vmem_limit_bytes=_VMEM_LIMIT,
        ),
        cost_estimate=cost,
    )(q_arr, k_arr, v_arr)


# ----------------------------------------------------------------------------
# MultiheadAttention forward (wrapper / glue)
# ----------------------------------------------------------------------------

class PallasMultiheadAttention:
    """Standard multi-head attention: forward(seqs, keys, values) -> (N, S, M)."""

    def __init__(self, model_dim, num_heads, key_dim=None, value_dim=None,
                 *, key=None, dtype=jnp.float32):
        if key is None:
            key = jax.random.PRNGKey(0)
        key_dim = key_dim if key_dim is not None else model_dim
        value_dim = value_dim if value_dim is not None else model_dim
        assert model_dim % num_heads == 0
        self.model_dim = model_dim
        self.num_heads = num_heads
        self.head_dim = model_dim // num_heads
        self.dtype = dtype

        ks = jax.random.split(key, 8)

        def init(k, shape, fan_in):
            bound = 1.0 / math.sqrt(fan_in)
            return jax.random.uniform(k, shape, dtype, minval=-bound, maxval=bound)

        # Reference parameters (f32, unscaled), stored pre-transposed (in, out)
        # so kernels never transpose and output stores are lane-dense.
        self.wq_t = init(ks[0], (model_dim, model_dim), model_dim)
        self.bq = init(ks[1], (model_dim,), model_dim)
        self.wk_t = init(ks[2], (key_dim, model_dim), key_dim)
        self.bk = init(ks[3], (model_dim,), key_dim)
        self.wv_t = init(ks[4], (value_dim, model_dim), value_dim)
        self.bv = init(ks[5], (model_dim,), value_dim)
        self.wo_t = init(ks[6], (model_dim, model_dim), model_dim)
        self.bo = init(ks[7], (model_dim,), model_dim)

        # Kernel-side copies: bf16 weights (MXU peak is bf16), f32 biases, and
        # the 1/sqrt(head_dim) softmax scale constant-folded into Wq / bq.
        scale = 1.0 / math.sqrt(self.head_dim)
        self.wq_t_k = (self.wq_t * scale).astype(jnp.bfloat16)
        self.bq_k = (self.bq * scale).astype(jnp.float32)
        self.wk_t_k = self.wk_t.astype(jnp.bfloat16)
        self.bk_k = self.bk.astype(jnp.float32)
        self.wv_t_k = self.wv_t.astype(jnp.bfloat16)
        self.bv_k = self.bv.astype(jnp.float32)
        self.wo_t_k = self.wo_t.astype(jnp.bfloat16)
        self.bo_k = self.bo.astype(jnp.float32)

        # Stacked weights for the fused self-attention QKV projection.
        self._can_fuse_qkv = (key_dim == model_dim and value_dim == model_dim)
        if self._can_fuse_qkv:
            self.w_qkv_t_k = jnp.stack([self.wq_t_k, self.wk_t_k, self.wv_t_k])
            self.b_qkv_k = jnp.stack([self.bq_k, self.bk_k, self.bv_k])

    def __call__(self, seqs, keys, values):
        N, S, M = seqs.shape
        _, Skv, _ = keys.shape
        H = self.num_heads

        if self._can_fuse_qkv and keys is seqs and values is seqs:
            # Self-attention fast path: single fused QKV matmul emitting a
            # stacked (3, N*S, M) bf16 activation; the flash kernel indexes
            # q/k/v directly out of the stack (no XLA lane-slice copies).
            qkv = pallas_qkv_dense(seqs.reshape(N * S, M), self.w_qkv_t_k,
                                   self.b_qkv_k, jnp.bfloat16)
            qkv = qkv.reshape(3, N, S, M)
            attn = pallas_sdpa(qkv, qkv, qkv, 0, 1, 2, H)   # (N, S, M) bf16
        else:
            q = pallas_dense(seqs.reshape(N * S, M), self.wq_t_k, self.bq_k,
                             jnp.bfloat16).reshape(1, N, S, M)
            k = pallas_dense(keys.reshape(N * Skv, keys.shape[-1]),
                             self.wk_t_k, self.bk_k,
                             jnp.bfloat16).reshape(1, N, Skv, M)
            v = pallas_dense(values.reshape(N * Skv, values.shape[-1]),
                             self.wv_t_k, self.bv_k,
                             jnp.bfloat16).reshape(1, N, Skv, M)
            attn = pallas_sdpa(q, k, v, 0, 0, 0, H)          # (N, S, M) bf16

        out = pallas_dense(attn.reshape(N * S, M), self.wo_t_k, self.bo_k,
                           self.dtype)
        # TODO(synk): attention-weight hooks, incremental state_bag decoding,
        # attention-bias caches (padding/causal masks) and dropout are
        # framework plumbing not covered by this forward-only kernel.
        return out.reshape(N, S, M)


# ----------------------------------------------------------------------------
# Pure-JAX reference for verification (f32, original semantics)
# ----------------------------------------------------------------------------

def reference_mha(mha, seqs, keys, values):
    N, S, M = seqs.shape
    _, Skv, _ = keys.shape
    H, Dh = mha.num_heads, mha.head_dim
    q = seqs @ mha.wq_t + mha.bq
    k = keys @ mha.wk_t + mha.bk
    v = values @ mha.wv_t + mha.bv
    q = q.reshape(N, S, H, Dh)
    k = k.reshape(N, Skv, H, Dh)
    v = v.reshape(N, Skv, H, Dh)
    s = jnp.einsum("nshd,nkhd->nhsk", q, k) / math.sqrt(Dh)
    p = jax.nn.softmax(s, axis=-1)
    o = jnp.einsum("nhsk,nkhd->nshd", p, v).reshape(N, S, M)
    return o @ mha.wo_t + mha.bo


# ----------------------------------------------------------------------------
# Main
# ----------------------------------------------------------------------------

if __name__ == "__main__":
    key = jax.random.PRNGKey(0)
    k_seq, k_key, k_val, k_param = jax.random.split(key, 4)

    N, S, Skv, M, H = 2, 16, 24, 64, 4

    seqs = jax.random.normal(k_seq, (N, S, M), jnp.float32)
    keys = jax.random.normal(k_key, (N, Skv, M), jnp.float32)
    values = jax.random.normal(k_val, (N, Skv, M), jnp.float32)

    mha = PallasMultiheadAttention(model_dim=M, num_heads=H, key=k_param)

    # Cross-attention path (separate q/k/v projections).
    out = jax.block_until_ready(mha(seqs, keys, values))
    ref = jax.block_until_ready(reference_mha(mha, seqs, keys, values))
    assert out.shape == (N, S, M), out.shape
    err = float(jnp.max(jnp.abs(out - ref)))
    # bf16 activations/weights in the kernels -> loosened tolerance vs f32 ref.
    assert jnp.allclose(out, ref, atol=5e-2, rtol=5e-2), err

    # Self-attention path (fused stacked-QKV projection).
    out_self = jax.block_until_ready(mha(seqs, seqs, seqs))
    ref_self = jax.block_until_ready(reference_mha(mha, seqs, seqs, seqs))
    err_self = float(jnp.max(jnp.abs(out_self - ref_self)))
    assert jnp.allclose(out_self, ref_self, atol=5e-2, rtol=5e-2), err_self

    print("KERNEL_OK")
</pallas_src>

<mosaic_0001>
module attributes {stable_mosaic.version = 11 : i64} {
  func.func @_dense_kernel(%arg0: i32, %arg1: i32, %arg2: i32, %arg3: memref<32x64xf32, #tpu.memory_space<vmem>>, %arg4: memref<64x64xbf16, #tpu.memory_space<vmem>>, %arg5: memref<1x64xf32, #tpu.memory_space<vmem>>, %arg6: memref<32x64xbf16, #tpu.memory_space<vmem>>, %arg7: memref<32x64xf32, #tpu.memory_space<vmem>>) attributes {dimension_semantics = [#tpu.dimension_semantics<parallel>, #tpu.dimension_semantics<parallel>, #tpu.dimension_semantics<arbitrary>], iteration_bounds = array<i64: 1, 1, 1>, scalar_prefetch = 0 : i64, scratch_operands = 1 : i64, tpu.core_type = #tpu.core_type<tc>, window_params = [{transform_indices = @transform_0, window_bounds = array<i64: 32, 64>}, {transform_indices = @transform_1, window_bounds = array<i64: 64, 64>}, {transform_indices = @transform_2, window_bounds = array<i64: 1, 64>}, {transform_indices = @transform_3, window_bounds = array<i64: 32, 64>}]} {
    %c0_i32 = arith.constant 0 : i32
    %0 = arith.cmpi eq, %arg2, %c0_i32 : i32
    %1 = arith.extui %0 : i1 to i32
    %c0_i32_0 = arith.constant 0 : i32
    %2 = arith.cmpi ne, %1, %c0_i32_0 : i32
    scf.if %2 {
      %cst_10 = arith.constant 0.000000e+00 : f32
      %13 = vector.broadcast %cst_10 : f32 to vector<32x64xf32>
      %c0_11 = arith.constant 0 : index
      %c0_12 = arith.constant 0 : index
      %14 = vector.load %arg7[%c0_11, %c0_12] : memref<32x64xf32, #tpu.memory_space<vmem>>, vector<32x64xf32>
      tpu.vector_store %arg7[%c0_11, %c0_12], %13 {strides = array<i32>} : memref<32x64xf32, #tpu.memory_space<vmem>>, vector<32x64xf32>,
    } else {
    }
    %c0 = arith.constant 0 : index
    %c0_1 = arith.constant 0 : index
    %3 = vector.load %arg7[%c0, %c0_1] : memref<32x64xf32, #tpu.memory_space<vmem>>, vector<32x64xf32>
    %c0_2 = arith.constant 0 : index
    %c0_3 = arith.constant 0 : index
    %4 = vector.load %arg3[%c0_2, %c0_3] : memref<32x64xf32, #tpu.memory_space<vmem>>, vector<32x64xf32>
    %5 = arith.truncf %4 : vector<32x64xf32> to vector<32x64xbf16>
    %c0_4 = arith.constant 0 : index
    %c0_5 = arith.constant 0 : index
    %6 = vector.load %arg4[%c0_4, %c0_5] : memref<64x64xbf16, #tpu.memory_space<vmem>>, vector<64x64xbf16>
    %cst = arith.constant dense<0.000000e+00> : vector<32x64xf32>
    %7 = tpu.matmul %5, %6, %cst {dimension_numbers = #tpu.dot_dimension_numbers<[1], [0], [0], [1], [0, 0, 1, 1], [], []>} : vector<32x64xbf16>, vector<64x64xbf16>, vector<32x64xf32> -> vector<32x64xf32>
    %8 = arith.addf %3, %7 : vector<32x64xf32>
    %c0_6 = arith.constant 0 : index
    %c0_7 = arith.constant 0 : index
    %9 = vector.load %arg7[%c0_6, %c0_7] : memref<32x64xf32, #tpu.memory_space<vmem>>, vector<32x64xf32>
    tpu.vector_store %arg7[%c0_6, %c0_7], %8 {strides = array<i32>} : memref<32x64xf32, #tpu.memory_space<vmem>>, vector<32x64xf32>,
    %c0_i32_8 = arith.constant 0 : i32
    %10 = arith.cmpi eq, %arg2, %c0_i32_8 : i32
    %11 = arith.extui %10 : i1 to i32
    %c0_i32_9 = arith.constant 0 : i32
    %12 = arith.cmpi ne, %11, %c0_i32_9 : i32
    scf.if %12 {
      %c0_10 = arith.constant 0 : index
      %c0_11 = arith.constant 0 : index
      %13 = vector.load %arg7[%c0_10, %c0_11] : memref<32x64xf32, #tpu.memory_space<vmem>>, vector<32x64xf32>
      %c0_12 = arith.constant 0 : index
      %c0_13 = arith.constant 0 : index
      %14 = vector.load %arg5[%c0_12, %c0_13] : memref<1x64xf32, #tpu.memory_space<vmem>>, vector<1x64xf32>
      %15 = vector.broadcast %14 : vector<1x64xf32> to vector<32x64xf32>
      %16 = arith.addf %13, %15 : vector<32x64xf32>
      %17 = arith.truncf %16 : vector<32x64xf32> to vector<32x64xbf16>
      %c0_14 = arith.constant 0 : index
      %c0_15 = arith.constant 0 : index
      %18 = vector.load %arg6[%c0_14, %c0_15] : memref<32x64xbf16, #tpu.memory_space<vmem>>, vector<32x64xbf16>
      tpu.vector_store %arg6[%c0_14, %c0_15], %17 {strides = array<i32>} : memref<32x64xbf16, #tpu.memory_space<vmem>>, vector<32x64xbf16>,
    } else {
    }
    return
  }
  func.func @transform_0(%arg0: i32, %arg1: i32, %arg2: i32) -> (i32, i32) {
    %c0_i32 = arith.constant 0 : i32
    return %arg0, %arg2 : i32, i32
  }
  func.func @transform_1(%arg0: i32, %arg1: i32, %arg2: i32) -> (i32, i32) {
    %c0_i32 = arith.constant 0 : i32
    return %arg2, %arg1 : i32, i32
  }
  func.func @transform_2(%arg0: i32, %arg1: i32, %arg2: i32) -> (i32, i32) {
    %c0_i32 = arith.constant 0 : i32
    %c0_i32_0 = arith.constant 0 : i32
    return %c0_i32, %arg1 : i32, i32
  }
  func.func @transform_3(%arg0: i32, %arg1: i32, %arg2: i32) -> (i32, i32) {
    %c0_i32 = arith.constant 0 : i32
    return %arg0, %arg1 : i32, i32
  }
}

</mosaic_0001>

<llo_original>
// kernel: tpu_custom_call.1
$region0: #{tpu_custom_call.1}
  #allocation0 [shape = 'u32[]', space=smem, size = 0x4, offset = 0x4, fixed_abs, tag = 'smem constant byte address 0x4 - core index']
  #allocation1 [shape = 'u32[72,128]{1,0:T(1,128)}', space=vmem, size = 0x9000, scoped, tag = 'internal scratch']
  #allocation2 [shape = 'f32[32,64]{1,0:T(8,128)}', space=vmem, size = 0x4000, scoped, tag = 'scratch operand']
  %s0 = inlined_call_operand.hbm [shape: f32[32,64], index: 0, kind: input, shape index: {}]
  %s1 = inlined_call_operand.hbm [shape: bf16[64,64], index: 1, kind: input, shape index: {}]
  %s2 = inlined_call_operand.vmem [shape: f32[1,64], index: 2, kind: input, shape index: {}]
  %s3 = inlined_call_operand.hbm [shape: bf16[32,64], index: 3, kind: output, shape index: {}]
  %s4 = sld [smem:[#allocation0]]
  $region38: #{tpu_custom_call.1} parent=0
    _
  %s6 = ssub.s32 1, %s4
  %s7 = scalar_select 0, %s6, %s4
  $region1: #{tpu_custom_call.1} parent=0
    #allocation3 [shape = 'u8[16384]{0}', space=vmem, size = 0x4000, scoped, tag = 'input window, operand 0, single buffered']
    #allocation4 [shape = 's32[1]{0}', space=sflag, size = 0x4, scoped, tag = 'scoped memory for tpu_custom_call.1']
    #allocation5 [shape = 's32[1]{0}', space=sflag, size = 0x4, scoped, tag = 'scoped memory for tpu_custom_call.1']
    #allocation6 [shape = 'u8[16384]{0}', space=vmem, size = 0x4000, scoped, tag = 'input window, operand 1, single buffered']
    #allocation7 [shape = 's32[1]{0}', space=sflag, size = 0x4, scoped, tag = 'scoped memory for tpu_custom_call.1']
    #allocation8 [shape = 'u8[8192]{0}', space=vmem, size = 0x2000, scoped, tag = 'output window, operand 0, single buffered']
    %8 = vsyncpa [#allocation4], 0
    %9 = vsyncpa [#allocation7], 0
    %10 = vsyncpa [#allocation5], 0
    // Predicated region
    $region2: #{tpu_custom_call.1} parent=1 // pred_check
      _
    $region3: #{tpu_custom_call.1} parent=1 // pred_check_branch
      %12 = sbr.rel (0) target = $region5
    $region4: #{tpu_custom_call.1} parent=1 // pred_region
      %14 = vsyncadd [#allocation4], 0
      %s15 = sshll.u32 %s0, 4
      %s16 = int_to_ptr.hbm [resolvable:$true] %s15
      %s17 = sshll.u32 [#allocation3], 4
      %s18 = int_to_ptr.vmem [resolvable:$true] %s17
      %23 = dma.hbm_to_vmem [thread:$0]  %s16, 512, %s18, [#allocation4], 128, 128, 8
    $region5: #{tpu_custom_call.1} parent=1 // pred_fallthru
      _
    // Predicated region
    $region6: #{tpu_custom_call.1} parent=1 // pred_check
      _
    $region7: #{tpu_custom_call.1} parent=1 // pred_check_branch
      %25 = sbr.rel (0) target = $region9
    $region8: #{tpu_custom_call.1} parent=1 // pred_region
      %27 = vsyncadd [#allocation7], 0
      %s28 = sshll.u32 %s1, 4
      %s29 = int_to_ptr.hbm [resolvable:$true] %s28
      %s30 = sshll.u32 [#allocation6], 4
      %s31 = int_to_ptr.vmem [resolvable:$true] %s30
      %36 = dma.hbm_to_vmem [thread:$0]  %s29, 512, %s31, [#allocation7], 64, 64, 4
    $region9: #{tpu_custom_call.1} parent=1 // pred_fallthru
      _
    // Predicated region
    $region10: #{tpu_custom_call.1} parent=1 // pred_check
      _
    $region11: #{tpu_custom_call.1} parent=1 // pred_check_branch
      %38 = sbr.rel (0) target = $region13
    $region12: #{tpu_custom_call.1} parent=1 // pred_region
      _
    $region13: #{tpu_custom_call.1} parent=1 // pred_fallthru
      _
    // Predicated region
    $region14: #{tpu_custom_call.1} parent=1 // pred_check
      _
    $region15: #{tpu_custom_call.1} parent=1 // pred_check_branch
      %40 = sbr.rel (0) target = $region17
    $region16: #{tpu_custom_call.1} parent=1 // pred_region
      %42 = dma.done [#allocation4], 512
    $region17: #{tpu_custom_call.1} parent=1 // pred_fallthru
      _
    // Predicated region
    $region18: #{tpu_custom_call.1} parent=1 // pred_check
      _
    $region19: #{tpu_custom_call.1} parent=1 // pred_check_branch
      %44 = sbr.rel (0) target = $region21
    $region20: #{tpu_custom_call.1} parent=1 // pred_region
      %46 = dma.done [#allocation7], 512
    $region21: #{tpu_custom_call.1} parent=1 // pred_fallthru
      _
    %p48 = scmp.eq.s32.totalorder 0, 0
    // Predicated region
    $region22: #{tpu_custom_call.1} parent=1 // pred_check
      %p49 = pneg %p48
    $region23: #{tpu_custom_call.1} parent=1 // pred_check_branch
      %51 = sbr.rel (%p49) target = $region25
    $region24: #{tpu_custom_call.1} parent=1 // pred_region
      %vm52 = vcmask 523264
      %53 = vst.msk [vmem:[#allocation2] sm:$0xff] %vm52, 0.0
      %54 = vst.msk [vmem:[#allocation2 + $0x8] sm:$0xff] %vm52, 0.0
      %55 = vst.msk [vmem:[#allocation2 + $0x10] sm:$0xff] %vm52, 0.0
      %56 = vst.msk [vmem:[#allocation2 + $0x18] sm:$0xff] %vm52, 0.0
    $region25: #{tpu_custom_call.1} parent=1 // pred_fallthru
      _
    %v57 = vld [vmem:[#allocation2] sm:$0xff]
    %v58 = vld [vmem:[#allocation2 + $0x8] sm:$0xff]
    %v59 = vld [vmem:[#allocation2 + $0x10] sm:$0xff]
    %v60 = vld [vmem:[#allocation2 + $0x18] sm:$0xff]
    %v61 = vld [vmem:[#allocation3] sm:$0xff]
    %v62 = vld [vmem:[#allocation3 + $0x8] sm:$0xff]
    %v63 = vld [vmem:[#allocation3 + $0x10] sm:$0xff]
    %v64 = vld [vmem:[#allocation3 + $0x18] sm:$0xff]
    %v65 = vpack.c.bf16 %v62, %v61
    %v66 = vpack.c.bf16 %v64, %v63
    %v67 = vld [vmem:[#allocation6] sm:$0xf]
    %v68 = vld [vmem:[#allocation6 + $0x4] sm:$0xf]
    %v69 = vld [vmem:[#allocation6 + $0x8] sm:$0xf]
    %v70 = vld [vmem:[#allocation6 + $0xc] sm:$0xf]
    %v71 = vld [vmem:[#allocation6 + $0x10] sm:$0xf]
    %v72 = vld [vmem:[#allocation6 + $0x14] sm:$0xf]
    %v73 = vld [vmem:[#allocation6 + $0x18] sm:$0xf]
    %v74 = vld [vmem:[#allocation6 + $0x1c] sm:$0xf]
    %v83 = vunpack.c.l.b16 %v67
    %v84 = vunpack.c.l.b16 %v68
    %v85 = vunpack.c.l.b16 %v69
    %v86 = vunpack.c.l.b16 %v70
    %v87 = vunpack.c.l.b16 %v71
    %v88 = vunpack.c.l.b16 %v72
    %v89 = vunpack.c.l.b16 %v73
    %v90 = vunpack.c.l.b16 %v74
    %v91 = vpack.c.b16 %v84, %v83
    %v92 = vpack.c.b16 %v86, %v85
    %v93 = vpack.c.b16 %v88, %v87
    %v94 = vpack.c.b16 %v90, %v89
    %vm99 = vcmask 523264
    %v101 = vsel %vm99, %v65, 0
    %v104 = vsel %vm99, %v66, 0
    %106 = vmatpush.bf16.msra.mxu0 0
    %107 = vmatpush.bf16.msra.mxu0 0
    %108 = vmatpush.bf16.msra.mxu0 0
    %109 = vmatpush.bf16.msra.mxu0 0
    %110 = vmatpush.bf16.msra.mxu0 %v94
    %111 = vmatpush.bf16.msra.mxu0 %v93
    %112 = vmatpush.bf16.msra.mxu0 %v92
    %113 = vmatpush.bf16.msra.mxu0 %v91
    %114 = vmatmul.bf16.gmra.mxu0 %v101
    %v115 = vpop.f32.mrf.mxu0
    %v116 = vadd.f32 0.0, %v115
    %v117 = vpop.f32.mrf.mxu0
    %v118 = vadd.f32 0.0, %v117
    %119 = vmatmul.bf16.gmra.mxu0 %v104
    %v120 = vpop.f32.mrf.mxu0
    %v121 = vadd.f32 0.0, %v120
    %v122 = vpop.f32.mrf.mxu0
    %v123 = vadd.f32 0.0, %v122
    %124 = vdwg.mxu0
    %v125 = vadd.f32 %v57, %v116
    %v126 = vadd.f32 %v58, %v118
    %v127 = vadd.f32 %v59, %v121
    %v128 = vadd.f32 %v60, %v123
    %129 = vst.msk [vmem:[#allocation2] sm:$0xff] %vm99, %v125
    %130 = vst.msk [vmem:[#allocation2 + $0x8] sm:$0xff] %vm99, %v126
    %131 = vst.msk [vmem:[#allocation2 + $0x10] sm:$0xff] %vm99, %v127
    %132 = vst.msk [vmem:[#allocation2 + $0x18] sm:$0xff] %vm99, %v128
    // Predicated region
    $region26: #{tpu_custom_call.1} parent=1 // pred_check
      %p133 = pneg %p48
    $region27: #{tpu_custom_call.1} parent=1 // pred_check_branch
      %135 = sbr.rel (%p133) target = $region29
    $region28: #{tpu_custom_call.1} parent=1 // pred_region
      %v136 = vld [vmem:[#allocation2] sm:$0xff]
      %v137 = vld [vmem:[#allocation2 + $0x8] sm:$0xff]
      %v138 = vld [vmem:[#allocation2 + $0x10] sm:$0xff]
      %v139 = vld [vmem:[#allocation2 + $0x18] sm:$0xff]
      %v140 = vld [vmem:[%s2] sm:$0x1]
      %v142 = vperm.slane %v140, 0
      %v144 = vadd.f32 %v136, %v142
      %v145 = vadd.f32 %v137, %v142
      %v146 = vadd.f32 %v138, %v142
      %v147 = vadd.f32 %v139, %v142
      %v148 = vpack.c.bf16 %v144, %v144
      %v149 = vpack.c.bf16 %v145, %v145
      %v150 = vpack.c.bf16 %v146, %v146
      %v151 = vpack.c.bf16 %v147, %v147
      %vm152 = vcmask 519168
      %153 = vst.msk [vmem:[#allocation8] sm:$0xf] %vm152, %v148
      %154 = vst.msk [vmem:[#allocation8 + $0x4] sm:$0xf] %vm152, %v149
      %155 = vst.msk [vmem:[#allocation8 + $0x8] sm:$0xf] %vm152, %v150
      %156 = vst.msk [vmem:[#allocation8 + $0xc] sm:$0xf] %vm152, %v151
    $region29: #{tpu_custom_call.1} parent=1 // pred_fallthru
      _
    // Predicated region
    $region30: #{tpu_custom_call.1} parent=1 // pred_check
      _
    $region31: #{tpu_custom_call.1} parent=1 // pred_check_branch
      %158 = sbr.rel (0) target = $region33
    $region32: #{tpu_custom_call.1} parent=1 // pred_region
      %160 = vsyncadd [#allocation5], 0
      %s161 = sshll.u32 [#allocation8], 4
      %s162 = int_to_ptr.vmem [resolvable:$true] %s161
      %s163 = sshll.u32 %s3, 4
      %s164 = int_to_ptr.hbm [resolvable:$true] %s163
      %169 = dma.vmem_to_hbm [thread:$0]  %s162, 256, %s164, [#allocation5], 64, 64, 4
    $region33: #{tpu_custom_call.1} parent=1 // pred_fallthru
      _
    // Predicated region
    $region34: #{tpu_custom_call.1} parent=1 // pred_check
      _
    $region35: #{tpu_custom_call.1} parent=1 // pred_check_branch
      %171 = sbr.rel (0) target = $region37
    $region36: #{tpu_custom_call.1} parent=1 // pred_region
      %173 = dma.done [#allocation5], 256
    $region37: #{tpu_custom_call.1} parent=1 // pred_fallthru
      _
    %174 = vsyncpa [#allocation4], 1
    %175 = vsyncpa [#allocation7], 1
    %176 = vsyncpa [#allocation5], 1

</llo_original>
